<compile_context>
chip_gen: v5e
topology: v5e:2x2
jax: 0.10.0
libtpu: 0.0.40
codegen_flags: <defaults>
</compile_context>

<pallas_src>
import functools

import jax
import jax.numpy as jnp
from jax import lax
from jax.experimental import pallas as pl
from jax.experimental.pallas import tpu as pltpu


def _attention_kernel(x_ref, wqkv_ref, wo_ref, b_ref, o_ref, ctx_ref, *,
                      heads, dim_head):
    """One batch row per grid step.

    x_ref    : (N, D)         compute dtype (bf16 in the fast path)
    wqkv_ref : (D, 3*H*d)     fused QKV weights, Q columns pre-scaled
    wo_ref   : (H*d, D)       output-projection weights
    b_ref    : (1, D) f32     output bias
    o_ref    : (N, D)         output block
    ctx_ref  : (N, H*d)       compute-dtype scratch holding all head contexts
    """
    inner = heads * dim_head
    x = x_ref[...]                                          # (N, D)

    # Fused QKV projection: full MXU output width, f32 accumulation, one cast.
    qkv = jnp.dot(x, wqkv_ref[...],
                  preferred_element_type=jnp.float32)       # (N, 3*H*d) f32
    qkv = qkv.astype(x.dtype)

    # Static per-head loop (H is small and known at trace time; static slices
    # keep all indexing free).  Scale is already folded into the Q columns.
    for h in range(heads):
        q = qkv[:, h * dim_head:(h + 1) * dim_head]                     # (N, d)
        k = qkv[:, inner + h * dim_head:inner + (h + 1) * dim_head]     # (N, d)
        v = qkv[:, 2 * inner + h * dim_head:2 * inner + (h + 1) * dim_head]

        # scores[i, j] = sum_t q[i, t] * k[j, t]
        dots = lax.dot_general(q, k, (((1,), (1,)), ((), ())),
                               preferred_element_type=jnp.float32)      # (N, N)

        # Numerically-stable softmax, normalization deferred past the PV matmul.
        m = jnp.max(dots, axis=-1, keepdims=True)
        p = jnp.exp(dots - m)                                           # f32
        l = jnp.sum(p, axis=-1, keepdims=True)                          # (N, 1)

        out_h = jnp.dot(p.astype(v.dtype), v,
                        preferred_element_type=jnp.float32)             # (N, d)
        out_h = out_h * pl.reciprocal(l, approx=True)

        ctx_ref[:, h * dim_head:(h + 1) * dim_head] = out_h.astype(ctx_ref.dtype)

    # Single output projection over the full H*d contraction depth, bias folded
    # into the final store.
    out = jnp.dot(ctx_ref[...], wo_ref[...],
                  preferred_element_type=jnp.float32)                   # (N, D)
    o_ref[...] = (out + b_ref[...].astype(jnp.float32)).astype(o_ref.dtype)


def prepare_attention_weights(w_qkv, w_out, b_out, *, heads, dim_head,
                              compute_dtype=jnp.bfloat16):
    """One-time weight preprocessing (hoist out of the per-call hot path)."""
    inner = heads * dim_head
    scale = dim_head ** (-0.5)
    # Fold softmax scale into the Q columns (first `inner` of 3*inner), in f32.
    w_qkv_s = w_qkv.astype(jnp.float32).at[:, :inner].multiply(scale)
    return (w_qkv_s.astype(compute_dtype),
            w_out.astype(compute_dtype),
            b_out.reshape(1, -1).astype(jnp.float32))


def attention_forward_prepared(x, w_qkv_p, w_out_p, b_out_p, *, heads, dim_head,
                               compute_dtype=jnp.bfloat16):
    """x: (B, N, D); weights already processed by prepare_attention_weights."""
    b, n, d_model = x.shape
    inner = heads * dim_head
    out_dtype = x.dtype
    x_c = x.astype(compute_dtype)

    kernel = functools.partial(_attention_kernel, heads=heads, dim_head=dim_head)

    return pl.pallas_call(
        kernel,
        out_shape=jax.ShapeDtypeStruct((b, n, d_model), out_dtype),
        grid_spec=pltpu.PrefetchScalarGridSpec(
            num_scalar_prefetch=0,
            grid=(b,),
            in_specs=[
                # x: one batch row per grid step.
                pl.BlockSpec((None, n, d_model), lambda i: (i, 0, 0)),
                # Weights / bias: full arrays, constant block index -> DMA'd
                # from HBM exactly once, then VMEM-resident for all steps.
                pl.BlockSpec((d_model, 3 * inner), lambda i: (0, 0)),
                pl.BlockSpec((inner, d_model), lambda i: (0, 0)),
                pl.BlockSpec((1, d_model), lambda i: (0, 0)),
            ],
            out_specs=pl.BlockSpec((None, n, d_model), lambda i: (i, 0, 0)),
            scratch_shapes=[pltpu.VMEM((n, inner), compute_dtype)],
        ),
        compiler_params=pltpu.CompilerParams(
            dimension_semantics=("parallel",),
            vmem_limit_bytes=48 * 1024 * 1024,   # headroom below v7x's 64 MiB
        ),
    )(x_c, w_qkv_p, w_out_p, b_out_p)


def attention_forward(x, w_qkv, w_out, b_out, *, heads, dim_head,
                      compute_dtype=jnp.bfloat16):
    """Convenience wrapper: prepare weights + run (prep should be cached)."""
    w_qkv_p, w_out_p, b_out_p = prepare_attention_weights(
        w_qkv, w_out, b_out, heads=heads, dim_head=dim_head,
        compute_dtype=compute_dtype)
    return attention_forward_prepared(
        x, w_qkv_p, w_out_p, b_out_p, heads=heads, dim_head=dim_head,
        compute_dtype=compute_dtype)


def attention_reference(x, w_qkv, w_out, b_out, *, heads, dim_head):
    """Plain-JAX f32 reference mirroring the PyTorch forward (mask=None, eval)."""
    b, n, d = x.shape
    inner_dim = heads * dim_head
    scale = dim_head ** (-0.5)
    qkv = jnp.einsum('bnd,de->bne', x, w_qkv)
    q, k, v = jnp.split(qkv, 3, axis=-1)

    def split_heads(t):
        return t.reshape(b, n, heads, dim_head).transpose(0, 2, 1, 3)

    q, k, v = map(split_heads, (q, k, v))
    dots = jnp.einsum('bhid,bhjd->bhij', q, k) * scale
    attn = jax.nn.softmax(dots, axis=-1)
    out = jnp.einsum('bhij,bhjd->bhid', attn, v)
    out = out.transpose(0, 2, 1, 3).reshape(b, n, inner_dim)
    return jnp.einsum('bne,ed->bnd', out, w_out) + b_out


if __name__ == "__main__":
    # Small shapes consistent with the module.
    B, N, DIM = 2, 8, 32
    HEADS, DIM_HEAD = 4, 8
    INNER = HEADS * DIM_HEAD

    key = jax.random.PRNGKey(0)
    kx, kq, ko, kb = jax.random.split(key, 4)

    x = jax.random.normal(kx, (B, N, DIM), dtype=jnp.float32)
    w_qkv = jax.random.uniform(kq, (DIM, 3 * INNER), dtype=jnp.float32,
                               minval=-1.0, maxval=1.0) * (DIM ** -0.5)
    w_out = jax.random.uniform(ko, (INNER, DIM), dtype=jnp.float32,
                               minval=-1.0, maxval=1.0) * (INNER ** -0.5)
    b_out = jax.random.uniform(kb, (DIM,), dtype=jnp.float32,
                               minval=-1.0, maxval=1.0) * (INNER ** -0.5)

    ref = attention_reference(x, w_qkv, w_out, b_out,
                              heads=HEADS, dim_head=DIM_HEAD)

    # f32-operand path: tight check (approx reciprocal is the only deviation).
    out_f32 = attention_forward(x, w_qkv, w_out, b_out,
                                heads=HEADS, dim_head=DIM_HEAD,
                                compute_dtype=jnp.float32)
    out_f32 = jax.block_until_ready(out_f32)
    assert out_f32.shape == (B, N, DIM)
    assert jnp.allclose(out_f32, ref, atol=5e-3, rtol=5e-3), "f32 path mismatch"

    # bf16 MXU-operand path (production configuration): looser tolerance.
    out_bf16 = attention_forward(x, w_qkv, w_out, b_out,
                                 heads=HEADS, dim_head=DIM_HEAD,
                                 compute_dtype=jnp.bfloat16)
    out_bf16 = jax.block_until_ready(out_bf16)
    assert out_bf16.shape == (B, N, DIM)
    assert jnp.allclose(out_bf16.astype(jnp.float32), ref,
                        atol=5e-2, rtol=5e-2), "bf16 path mismatch"

    print("KERNEL_OK")
</pallas_src>

<mosaic_0001>
module attributes {stable_mosaic.version = 11 : i64} {
  func.func @_attention_kernel(%arg0: i32, %arg1: memref<1x8x32xf32, #tpu.memory_space<vmem>>, %arg2: memref<32x96xf32, #tpu.memory_space<vmem>>, %arg3: memref<32x32xf32, #tpu.memory_space<vmem>>, %arg4: memref<1x32xf32, #tpu.memory_space<vmem>>, %arg5: memref<1x8x32xf32, #tpu.memory_space<vmem>>, %arg6: memref<8x32xf32, #tpu.memory_space<vmem>>) attributes {dimension_semantics = [#tpu.dimension_semantics<parallel>], iteration_bounds = array<i64: 2>, scalar_prefetch = 0 : i64, scratch_operands = 1 : i64, tpu.core_type = #tpu.core_type<tc>, window_params = [{transform_indices = @transform_0, window_bounds = array<i64: 1, 8, 32>}, {pipeline_mode = #tpu.pipeline_mode<synchronous>, transform_indices = @transform_1, window_bounds = array<i64: 32, 96>}, {pipeline_mode = #tpu.pipeline_mode<synchronous>, transform_indices = @transform_2, window_bounds = array<i64: 32, 32>}, {pipeline_mode = #tpu.pipeline_mode<synchronous>, transform_indices = @transform_3, window_bounds = array<i64: 1, 32>}, {transform_indices = @transform_4, window_bounds = array<i64: 1, 8, 32>}]} {
    %c0 = arith.constant 0 : index
    %c0_0 = arith.constant 0 : index
    %c0_1 = arith.constant 0 : index
    %0 = vector.load %arg1[%c0, %c0_0, %c0_1] : memref<1x8x32xf32, #tpu.memory_space<vmem>>, vector<1x8x32xf32>
    %1 = vector.shape_cast %0 : vector<1x8x32xf32> to vector<8x32xf32>
    %c0_2 = arith.constant 0 : index
    %c0_3 = arith.constant 0 : index
    %2 = vector.load %arg2[%c0_2, %c0_3] : memref<32x96xf32, #tpu.memory_space<vmem>>, vector<32x96xf32>
    %cst = arith.constant dense<0.000000e+00> : vector<8x96xf32>
    %3 = tpu.matmul %1, %2, %cst {dimension_numbers = #tpu.dot_dimension_numbers<[1], [0], [0], [1], [0, 0, 1, 1], [], []>} : vector<8x32xf32>, vector<32x96xf32>, vector<8x96xf32> -> vector<8x96xf32>
    %4 = vector.extract_strided_slice %3 {offsets = [0, 0], sizes = [8, 8], strides = [1, 1]} : vector<8x96xf32> to vector<8x8xf32>
    %5 = vector.extract_strided_slice %3 {offsets = [0, 32], sizes = [8, 8], strides = [1, 1]} : vector<8x96xf32> to vector<8x8xf32>
    %6 = vector.extract_strided_slice %3 {offsets = [0, 64], sizes = [8, 8], strides = [1, 1]} : vector<8x96xf32> to vector<8x8xf32>
    %cst_4 = arith.constant dense<0.000000e+00> : vector<8x8xf32>
    %7 = tpu.matmul %4, %5, %cst_4 {dimension_numbers = #tpu.dot_dimension_numbers<[1], [1], [0], [0], [0, 0, 1, 0], [], []>} : vector<8x8xf32>, vector<8x8xf32>, vector<8x8xf32> -> vector<8x8xf32>
    %cst_5 = arith.constant dense<0xFF800000> : vector<8xf32>
    %8 = vector.multi_reduction <maximumf>, %7, %cst_5 [1] : vector<8x8xf32> to vector<8xf32>
    %9 = vector.shape_cast %8 : vector<8xf32> to vector<8x1xf32>
    %10 = vector.broadcast %9 : vector<8x1xf32> to vector<8x8xf32>
    %11 = arith.subf %7, %10 : vector<8x8xf32>
    %12 = math.exp %11 : vector<8x8xf32>
    %cst_6 = arith.constant dense<0.000000e+00> : vector<8xf32>
    %13 = vector.multi_reduction <add>, %12, %cst_6 [1] : vector<8x8xf32> to vector<8xf32>
    %14 = vector.shape_cast %13 : vector<8xf32> to vector<8x1xf32>
    %cst_7 = arith.constant dense<0.000000e+00> : vector<8x8xf32>
    %15 = tpu.matmul %12, %6, %cst_7 {dimension_numbers = #tpu.dot_dimension_numbers<[1], [0], [0], [1], [0, 0, 1, 1], [], []>} : vector<8x8xf32>, vector<8x8xf32>, vector<8x8xf32> -> vector<8x8xf32>
    %16 = tpu.reciprocal %14 {approx = true} : vector<8x1xf32> -> vector<8x1xf32>
    %17 = vector.broadcast %16 : vector<8x1xf32> to vector<8x8xf32>
    %18 = arith.mulf %15, %17 : vector<8x8xf32>
    %c0_8 = arith.constant 0 : index
    %c0_9 = arith.constant 0 : index
    %19 = vector.load %arg6[%c0_8, %c0_9] : memref<8x32xf32, #tpu.memory_space<vmem>>, vector<8x8xf32>
    tpu.vector_store %arg6[%c0_8, %c0_9], %18 {strides = array<i32>} : memref<8x32xf32, #tpu.memory_space<vmem>>, vector<8x8xf32>,
    %20 = vector.extract_strided_slice %3 {offsets = [0, 8], sizes = [8, 8], strides = [1, 1]} : vector<8x96xf32> to vector<8x8xf32>
    %21 = vector.extract_strided_slice %3 {offsets = [0, 40], sizes = [8, 8], strides = [1, 1]} : vector<8x96xf32> to vector<8x8xf32>
    %22 = vector.extract_strided_slice %3 {offsets = [0, 72], sizes = [8, 8], strides = [1, 1]} : vector<8x96xf32> to vector<8x8xf32>
    %cst_10 = arith.constant dense<0.000000e+00> : vector<8x8xf32>
    %23 = tpu.matmul %20, %21, %cst_10 {dimension_numbers = #tpu.dot_dimension_numbers<[1], [1], [0], [0], [0, 0, 1, 0], [], []>} : vector<8x8xf32>, vector<8x8xf32>, vector<8x8xf32> -> vector<8x8xf32>
    %cst_11 = arith.constant dense<0xFF800000> : vector<8xf32>
    %24 = vector.multi_reduction <maximumf>, %23, %cst_11 [1] : vector<8x8xf32> to vector<8xf32>
    %25 = vector.shape_cast %24 : vector<8xf32> to vector<8x1xf32>
    %26 = vector.broadcast %25 : vector<8x1xf32> to vector<8x8xf32>
    %27 = arith.subf %23, %26 : vector<8x8xf32>
    %28 = math.exp %27 : vector<8x8xf32>
    %cst_12 = arith.constant dense<0.000000e+00> : vector<8xf32>
    %29 = vector.multi_reduction <add>, %28, %cst_12 [1] : vector<8x8xf32> to vector<8xf32>
    %30 = vector.shape_cast %29 : vector<8xf32> to vector<8x1xf32>
    %cst_13 = arith.constant dense<0.000000e+00> : vector<8x8xf32>
    %31 = tpu.matmul %28, %22, %cst_13 {dimension_numbers = #tpu.dot_dimension_numbers<[1], [0], [0], [1], [0, 0, 1, 1], [], []>} : vector<8x8xf32>, vector<8x8xf32>, vector<8x8xf32> -> vector<8x8xf32>
    %32 = tpu.reciprocal %30 {approx = true} : vector<8x1xf32> -> vector<8x1xf32>
    %33 = vector.broadcast %32 : vector<8x1xf32> to vector<8x8xf32>
    %34 = arith.mulf %31, %33 : vector<8x8xf32>
    %c0_14 = arith.constant 0 : index
    %c8 = arith.constant 8 : index
    %35 = vector.load %arg6[%c0_14, %c8] : memref<8x32xf32, #tpu.memory_space<vmem>>, vector<8x8xf32>
    tpu.vector_store %arg6[%c0_14, %c8], %34 {strides = array<i32>} : memref<8x32xf32, #tpu.memory_space<vmem>>, vector<8x8xf32>,
    %36 = vector.extract_strided_slice %3 {offsets = [0, 16], sizes = [8, 8], strides = [1, 1]} : vector<8x96xf32> to vector<8x8xf32>
    %37 = vector.extract_strided_slice %3 {offsets = [0, 48], sizes = [8, 8], strides = [1, 1]} : vector<8x96xf32> to vector<8x8xf32>
    %38 = vector.extract_strided_slice %3 {offsets = [0, 80], sizes = [8, 8], strides = [1, 1]} : vector<8x96xf32> to vector<8x8xf32>
    %cst_15 = arith.constant dense<0.000000e+00> : vector<8x8xf32>
    %39 = tpu.matmul %36, %37, %cst_15 {dimension_numbers = #tpu.dot_dimension_numbers<[1], [1], [0], [0], [0, 0, 1, 0], [], []>} : vector<8x8xf32>, vector<8x8xf32>, vector<8x8xf32> -> vector<8x8xf32>
    %cst_16 = arith.constant dense<0xFF800000> : vector<8xf32>
    %40 = vector.multi_reduction <maximumf>, %39, %cst_16 [1] : vector<8x8xf32> to vector<8xf32>
    %41 = vector.shape_cast %40 : vector<8xf32> to vector<8x1xf32>
    %42 = vector.broadcast %41 : vector<8x1xf32> to vector<8x8xf32>
    %43 = arith.subf %39, %42 : vector<8x8xf32>
    %44 = math.exp %43 : vector<8x8xf32>
    %cst_17 = arith.constant dense<0.000000e+00> : vector<8xf32>
    %45 = vector.multi_reduction <add>, %44, %cst_17 [1] : vector<8x8xf32> to vector<8xf32>
    %46 = vector.shape_cast %45 : vector<8xf32> to vector<8x1xf32>
    %cst_18 = arith.constant dense<0.000000e+00> : vector<8x8xf32>
    %47 = tpu.matmul %44, %38, %cst_18 {dimension_numbers = #tpu.dot_dimension_numbers<[1], [0], [0], [1], [0, 0, 1, 1], [], []>} : vector<8x8xf32>, vector<8x8xf32>, vector<8x8xf32> -> vector<8x8xf32>
    %48 = tpu.reciprocal %46 {approx = true} : vector<8x1xf32> -> vector<8x1xf32>
    %49 = vector.broadcast %48 : vector<8x1xf32> to vector<8x8xf32>
    %50 = arith.mulf %47, %49 : vector<8x8xf32>
    %c0_19 = arith.constant 0 : index
    %c16 = arith.constant 16 : index
    %51 = vector.load %arg6[%c0_19, %c16] : memref<8x32xf32, #tpu.memory_space<vmem>>, vector<8x8xf32>
    tpu.vector_store %arg6[%c0_19, %c16], %50 {strides = array<i32>} : memref<8x32xf32, #tpu.memory_space<vmem>>, vector<8x8xf32>,
    %52 = vector.extract_strided_slice %3 {offsets = [0, 24], sizes = [8, 8], strides = [1, 1]} : vector<8x96xf32> to vector<8x8xf32>
    %53 = vector.extract_strided_slice %3 {offsets = [0, 56], sizes = [8, 8], strides = [1, 1]} : vector<8x96xf32> to vector<8x8xf32>
    %54 = vector.extract_strided_slice %3 {offsets = [0, 88], sizes = [8, 8], strides = [1, 1]} : vector<8x96xf32> to vector<8x8xf32>
    %cst_20 = arith.constant dense<0.000000e+00> : vector<8x8xf32>
    %55 = tpu.matmul %52, %53, %cst_20 {dimension_numbers = #tpu.dot_dimension_numbers<[1], [1], [0], [0], [0, 0, 1, 0], [], []>} : vector<8x8xf32>, vector<8x8xf32>, vector<8x8xf32> -> vector<8x8xf32>
    %cst_21 = arith.constant dense<0xFF800000> : vector<8xf32>
    %56 = vector.multi_reduction <maximumf>, %55, %cst_21 [1] : vector<8x8xf32> to vector<8xf32>
    %57 = vector.shape_cast %56 : vector<8xf32> to vector<8x1xf32>
    %58 = vector.broadcast %57 : vector<8x1xf32> to vector<8x8xf32>
    %59 = arith.subf %55, %58 : vector<8x8xf32>
    %60 = math.exp %59 : vector<8x8xf32>
    %cst_22 = arith.constant dense<0.000000e+00> : vector<8xf32>
    %61 = vector.multi_reduction <add>, %60, %cst_22 [1] : vector<8x8xf32> to vector<8xf32>
    %62 = vector.shape_cast %61 : vector<8xf32> to vector<8x1xf32>
    %cst_23 = arith.constant dense<0.000000e+00> : vector<8x8xf32>
    %63 = tpu.matmul %60, %54, %cst_23 {dimension_numbers = #tpu.dot_dimension_numbers<[1], [0], [0], [1], [0, 0, 1, 1], [], []>} : vector<8x8xf32>, vector<8x8xf32>, vector<8x8xf32> -> vector<8x8xf32>
    %64 = tpu.reciprocal %62 {approx = true} : vector<8x1xf32> -> vector<8x1xf32>
    %65 = vector.broadcast %64 : vector<8x1xf32> to vector<8x8xf32>
    %66 = arith.mulf %63, %65 : vector<8x8xf32>
    %c0_24 = arith.constant 0 : index
    %c24 = arith.constant 24 : index
    %67 = vector.load %arg6[%c0_24, %c24] : memref<8x32xf32, #tpu.memory_space<vmem>>, vector<8x8xf32>
    tpu.vector_store %arg6[%c0_24, %c24], %66 {strides = array<i32>} : memref<8x32xf32, #tpu.memory_space<vmem>>, vector<8x8xf32>,
    %c0_25 = arith.constant 0 : index
    %c0_26 = arith.constant 0 : index
    %68 = vector.load %arg6[%c0_25, %c0_26] : memref<8x32xf32, #tpu.memory_space<vmem>>, vector<8x32xf32>
    %c0_27 = arith.constant 0 : index
    %c0_28 = arith.constant 0 : index
    %69 = vector.load %arg3[%c0_27, %c0_28] : memref<32x32xf32, #tpu.memory_space<vmem>>, vector<32x32xf32>
    %cst_29 = arith.constant dense<0.000000e+00> : vector<8x32xf32>
    %70 = tpu.matmul %68, %69, %cst_29 {dimension_numbers = #tpu.dot_dimension_numbers<[1], [0], [0], [1], [0, 0, 1, 1], [], []>} : vector<8x32xf32>, vector<32x32xf32>, vector<8x32xf32> -> vector<8x32xf32>
    %c0_30 = arith.constant 0 : index
    %c0_31 = arith.constant 0 : index
    %71 = vector.load %arg4[%c0_30, %c0_31] : memref<1x32xf32, #tpu.memory_space<vmem>>, vector<1x32xf32>
    %72 = vector.broadcast %71 : vector<1x32xf32> to vector<8x32xf32>
    %73 = arith.addf %70, %72 : vector<8x32xf32>
    %c0_32 = arith.constant 0 : index
    %c0_33 = arith.constant 0 : index
    %c0_34 = arith.constant 0 : index
    %74 = vector.load %arg5[%c0_32, %c0_33, %c0_34] : memref<1x8x32xf32, #tpu.memory_space<vmem>>, vector<1x8x32xf32>
    %75 = vector.shape_cast %74 : vector<1x8x32xf32> to vector<8x32xf32>
    %76 = vector.shape_cast %73 : vector<8x32xf32> to vector<1x8x32xf32>
    tpu.vector_store %arg5[%c0_32, %c0_33, %c0_34], %76 {strides = array<i32>} : memref<1x8x32xf32, #tpu.memory_space<vmem>>, vector<1x8x32xf32>,
    return
  }
  func.func @transform_0(%arg0: i32) -> (i32, i32, i32) {
    %c0_i32 = arith.constant 0 : i32
    %c0_i32_0 = arith.constant 0 : i32
    %c0_i32_1 = arith.constant 0 : i32
    return %arg0, %c0_i32, %c0_i32_0 : i32, i32, i32
  }
  func.func @transform_1(%arg0: i32) -> (i32, i32) {
    %c0_i32 = arith.constant 0 : i32
    %c0_i32_0 = arith.constant 0 : i32
    %c0_i32_1 = arith.constant 0 : i32
    return %c0_i32, %c0_i32_0 : i32, i32
  }
  func.func @transform_2(%arg0: i32) -> (i32, i32) {
    %c0_i32 = arith.constant 0 : i32
    %c0_i32_0 = arith.constant 0 : i32
    %c0_i32_1 = arith.constant 0 : i32
    return %c0_i32, %c0_i32_0 : i32, i32
  }
  func.func @transform_3(%arg0: i32) -> (i32, i32) {
    %c0_i32 = arith.constant 0 : i32
    %c0_i32_0 = arith.constant 0 : i32
    %c0_i32_1 = arith.constant 0 : i32
    return %c0_i32, %c0_i32_0 : i32, i32
  }
  func.func @transform_4(%arg0: i32) -> (i32, i32, i32) {
    %c0_i32 = arith.constant 0 : i32
    %c0_i32_0 = arith.constant 0 : i32
    %c0_i32_1 = arith.constant 0 : i32
    return %arg0, %c0_i32, %c0_i32_0 : i32, i32, i32
  }
}

</mosaic_0001>

<llo_original>
// kernel: tpu_custom_call.1
$region0: #{tpu_custom_call.1}
  #allocation0 [shape = 'u32[]', space=smem, size = 0x4, offset = 0x4, fixed_abs, tag = 'smem constant byte address 0x4 - core index']
  #allocation1 [shape = 'u32[72,128]{1,0:T(1,128)}', space=vmem, size = 0x9000, scoped, tag = 'internal scratch']
  #allocation2 [shape = 'f32[8,32]{1,0:T(8,128)}', space=vmem, size = 0x1000, scoped, tag = 'scratch operand']
  %s0 = inlined_call_operand.hbm [shape: f32[2,8,32], index: 0, kind: input, shape index: {}]
  %s1 = inlined_call_operand.hbm [shape: f32[32,96], index: 1, kind: input, shape index: {}]
  %s2 = inlined_call_operand.hbm [shape: f32[32,32], index: 2, kind: input, shape index: {}]
  %s3 = inlined_call_operand.vmem [shape: f32[1,32], index: 3, kind: input, shape index: {}]
  %s4 = inlined_call_operand.hbm [shape: f32[2,8,32], index: 4, kind: output, shape index: {}]
  %s5 = sld [smem:[#allocation0]]
  $region61: #{tpu_custom_call.1} parent=0
    _
  %s7 = ssub.s32 1, %s5
  %s8 = scalar_select 0, %s7, %s5
  $region1: #{tpu_custom_call.1} parent=0
    #allocation3 [shape = 'u8[8192]{0}', space=vmem, size = 0x2000, scoped, tag = 'input window, operand 0']
    #allocation4 [shape = 's32[2]{0}', space=sflag, size = 0x8, scoped, tag = 'scoped memory for tpu_custom_call.1']
    #allocation5 [shape = 's32[2]{0}', space=sflag, size = 0x8, scoped, tag = 'scoped memory for tpu_custom_call.1']
    #allocation6 [shape = 'u8[16384]{0}', space=vmem, size = 0x4000, scoped, tag = 'input window, operand 1, single buffered']
    #allocation7 [shape = 's32[1]{0}', space=sflag, size = 0x4, scoped, tag = 'scoped memory for tpu_custom_call.1']
    #allocation8 [shape = 'u8[16384]{0}', space=vmem, size = 0x4000, scoped, tag = 'input window, operand 2, single buffered']
    #allocation9 [shape = 'u8[8192]{0}', space=vmem, size = 0x2000, scoped, tag = 'output window, operand 0']
    %9 = vsyncpa [#allocation4], 0
    %s10 = scalar_lea.sflag [#allocation4], 1
    %11 = vsyncpa %s10, 0
    %12 = vsyncpa [#allocation7], 0
    %13 = vsyncpa [#allocation5], 0
    %s14 = scalar_lea.sflag [#allocation5], 1
    %15 = vsyncpa %s14, 0
    loop: start=0, step=1, limit=4
    $region2: #{tpu_custom_call.1} parent=1 // loop_pre_header
      _
    $region3: #{tpu_custom_call.1} parent=1 // loop_header
      %s17 = sphi 0, %s21
      %p18 = scmp.ge.s32.totalorder %s17, 4
      %s27 = sphi 0, %s29
      %s30 = sphi 0, %s27
      %s31 = sphi 0, %s30
      %s47 = sphi 0, %s31
      %s51 = sphi 0, %s51
      %s53 = sphi 0, %s51
      %s54 = sphi 0, %s53
      %s68 = sphi 0, %s54
      %s72 = sphi 0, %s72
      %s74 = sphi 0, %s72
      %s75 = sphi 0, %s74
      %s89 = sphi 0, %s75
      %s93 = sphi 0, %s93
      %s95 = sphi 0, %s93
      %s96 = sphi 0, %s95
      %s110 = sphi 0, %s96
      %s116 = sphi 0, %s118
      %s119 = sphi 0, %s116
      %s120 = sphi 0, %s119
      %s136 = sphi 0, %s120
    $region4: #{tpu_custom_call.1} parent=1 // loop_header_branch
      %20 = sbr.rel (%p18) target = $region8
    $region5: #{tpu_custom_call.1} parent=1 // loop_body
      %s22 = ssub.s32 %s17, 1
      %s23 = ssub.s32 %s17, 2
      %s24 = sadd.s32 %s17, 1
      %s25 = ssub.s32 %s17, %s24
      %p26 = scmp.eq.s32.totalorder %s25, 0
      %s28 = sadd.s32 %s27, 1
      %s29 = scalar_select %p26, %s27, %s28
      %p32 = pneg %p26
      %p33 = scmp.eq.s32.totalorder %s17, 1
      %p34 = por %p32, %p33
      %p35 = scmp.ne.s32.totalorder %s27, %s30
      %p36 = scmp.eq.s32.totalorder %s17, 0
      %p37 = por %p35, %p36
      %p38 = scmp.ne.s32.totalorder %s27, %s30
      %p39 = scmp.eq.s32.totalorder %s22, 1
      %p40 = por %p38, %p39
      %p41 = scmp.ne.s32.totalorder %s30, %s31
      %p42 = scmp.eq.s32.totalorder %s22, 0
      %p43 = por %p41, %p42
      %p44 = scmp.ne.s32.totalorder %s30, %s31
      %p45 = scmp.eq.s32.totalorder %s23, 1
      %p46 = por %p44, %p45
      %p48 = scmp.ne.s32.totalorder %s31, %s47
      %p49 = scmp.eq.s32.totalorder %s23, 0
      %p50 = por %p48, %p49
      %s52 = sadd.s32 %s51, 1
      %p55 = scmp.eq.s32.totalorder %s17, 1
      %p56 = scmp.ne.s32.totalorder %s51, %s53
      %p57 = scmp.eq.s32.totalorder %s17, 0
      %p58 = por %p56, %p57
      %p59 = scmp.ne.s32.totalorder %s51, %s53
      %p60 = scmp.eq.s32.totalorder %s22, 1
      %p61 = por %p59, %p60
      %p62 = scmp.ne.s32.totalorder %s53, %s54
      %p63 = scmp.eq.s32.totalorder %s22, 0
      %p64 = por %p62, %p63
      %p65 = scmp.ne.s32.totalorder %s53, %s54
      %p66 = scmp.eq.s32.totalorder %s23, 1
      %p67 = por %p65, %p66
      %p69 = scmp.ne.s32.totalorder %s54, %s68
      %p70 = scmp.eq.s32.totalorder %s23, 0
      %p71 = por %p69, %p70
      %s73 = sadd.s32 %s72, 1
      %p76 = scmp.eq.s32.totalorder %s17, 1
      %p77 = scmp.ne.s32.totalorder %s72, %s74
      %p78 = scmp.eq.s32.totalorder %s17, 0
      %p79 = por %p77, %p78
      %p80 = scmp.ne.s32.totalorder %s72, %s74
      %p81 = scmp.eq.s32.totalorder %s22, 1
      %p82 = por %p80, %p81
      %p83 = scmp.ne.s32.totalorder %s74, %s75
      %p84 = scmp.eq.s32.totalorder %s22, 0
      %p85 = por %p83, %p84
      %p86 = scmp.ne.s32.totalorder %s74, %s75
      %p87 = scmp.eq.s32.totalorder %s23, 1
      %p88 = por %p86, %p87
      %p90 = scmp.ne.s32.totalorder %s75, %s89
      %p91 = scmp.eq.s32.totalorder %s23, 0
      %p92 = por %p90, %p91
      %s94 = sadd.s32 %s93, 1
      %p97 = scmp.eq.s32.totalorder %s17, 1
      %p98 = scmp.ne.s32.totalorder %s93, %s95
      %p99 = scmp.eq.s32.totalorder %s17, 0
      %p100 = por %p98, %p99
      %p101 = scmp.ne.s32.totalorder %s93, %s95
      %p102 = scmp.eq.s32.totalorder %s22, 1
      %p103 = por %p101, %p102
      %p104 = scmp.ne.s32.totalorder %s95, %s96
      %p105 = scmp.eq.s32.totalorder %s22, 0
      %p106 = por %p104, %p105
      %p107 = scmp.ne.s32.totalorder %s95, %s96
      %p108 = scmp.eq.s32.totalorder %s23, 1
      %p109 = por %p107, %p108
      %p111 = scmp.ne.s32.totalorder %s96, %s110
      %p112 = scmp.eq.s32.totalorder %s23, 0
      %p113 = por %p111, %p112
      %s114 = ssub.s32 %s17, %s24
      %p115 = scmp.eq.s32.totalorder %s114, 0
      %s117 = sadd.s32 %s116, 1
      %s118 = scalar_select %p115, %s116, %s117
      %p121 = pneg %p115
      %p122 = scmp.eq.s32.totalorder %s17, 1
      %p123 = por %p121, %p122
      %p124 = scmp.ne.s32.totalorder %s116, %s119
      %p125 = scmp.eq.s32.totalorder %s17, 0
      %p126 = por %p124, %p125
      %p127 = scmp.ne.s32.totalorder %s116, %s119
      %p128 = scmp.eq.s32.totalorder %s22, 1
      %p129 = por %p127, %p128
      %p130 = scmp.ne.s32.totalorder %s119, %s120
      %p131 = scmp.eq.s32.totalorder %s22, 0
      %p132 = por %p130, %p131
      %p133 = scmp.ne.s32.totalorder %s119, %s120
      %p134 = scmp.eq.s32.totalorder %s23, 1
      %p135 = por %p133, %p134
      %p137 = scmp.ne.s32.totalorder %s120, %s136
      %p138 = scmp.eq.s32.totalorder %s23, 0
      %p139 = por %p137, %p138
      %p140 = scmp.le.s32.totalorder 1, %s17
      %p141 = scmp.lt.s32.totalorder %s17, 3
      %p142 = pnand %p140, %p141
      %p143 = pneg %p142
      // Predicated region
      $region9: #{tpu_custom_call.1} parent=5 // pred_check
        _
      $region10: #{tpu_custom_call.1} parent=5 // pred_check_branch
        %145 = sbr.rel (%p142) target = $region12
      $region11: #{tpu_custom_call.1} parent=5 // pred_region
        %s146 = ssub.s32 %s17, 1
        // Predicated region
        $region13: #{tpu_custom_call.1} parent=11 // pred_check
          %p147 = pneg %p64
        $region14: #{tpu_custom_call.1} parent=11 // pred_check_branch
          %149 = sbr.rel (%p147) target = $region16
        $region15: #{tpu_custom_call.1} parent=11 // pred_region
          %151 = vsyncadd [#allocation7], 0
          %s152 = sshll.u32 %s1, 4
          %s153 = int_to_ptr.hbm [resolvable:$true] %s152
          %s154 = sshll.u32 [#allocation6], 4
          %s155 = int_to_ptr.vmem [resolvable:$true] %s154
          %160 = dma.hbm_to_vmem [thread:$0]  %s153, 512, %s155, [#allocation7], 128, 128, 8
        $region16: #{tpu_custom_call.1} parent=11 // pred_fallthru
          _
        // Predicated region
        $region17: #{tpu_custom_call.1} parent=11 // pred_check
          %p161 = pneg %p85
        $region18: #{tpu_custom_call.1} parent=11 // pred_check_branch
          %163 = sbr.rel (%p161) target = $region20
        $region19: #{tpu_custom_call.1} parent=11 // pred_region
          %165 = vsyncadd [#allocation7], 0
          %s166 = sshll.u32 %s2, 4
          %s167 = int_to_ptr.hbm [resolvable:$true] %s166
          %s168 = sshll.u32 [#allocation8], 4
          %s169 = int_to_ptr.vmem [resolvable:$true] %s168
          %174 = dma.hbm_to_vmem [thread:$0]  %s167, 512, %s169, [#allocation7], 128, 128, 8
        $region20: #{tpu_custom_call.1} parent=11 // pred_fallthru
          _
        // Predicated region
        $region21: #{tpu_custom_call.1} parent=11 // pred_check
          %p175 = pneg %p106
        $region22: #{tpu_custom_call.1} parent=11 // pred_check_branch
          %177 = sbr.rel (%p175) target = $region24
        $region23: #{tpu_custom_call.1} parent=11 // pred_region
          _
        $region24: #{tpu_custom_call.1} parent=11 // pred_fallthru
          _
      $region12: #{tpu_custom_call.1} parent=5 // pred_fallthru
        _
      %p178 = scmp.lt.s32.totalorder %s17, 2
      // Predicated region
      $region25: #{tpu_custom_call.1} parent=5 // pred_check
        %p179 = pneg %p178
      $region26: #{tpu_custom_call.1} parent=5 // pred_check_branch
        %181 = sbr.rel (%p179) target = $region28
      $region27: #{tpu_custom_call.1} parent=5 // pred_region
        // Predicated region
        $region29: #{tpu_custom_call.1} parent=27 // pred_check
          %p182 = pneg %p37
        $region30: #{tpu_custom_call.1} parent=27 // pred_check_branch
          %184 = sbr.rel (%p182) target = $region32
        $region31: #{tpu_custom_call.1} parent=27 // pred_region
          %s185 = sand.u32 %s27, 1
          %s186 = scalar_lea.sflag [#allocation4], %s185
          %s187 = sand.u32 %s27, 1
          %s188 = smul.addr %s187, 8
          %s189 = scalar_lea.vmem [#allocation3], %s188
          %191 = vsyncadd %s186, 0
          %s192 = smul.addr %s17, 8
          %s193 = scalar_lea.hbm %s0, %s192
          %s195 = sshll.u32 %s193, 4
          %s196 = int_to_ptr.hbm [resolvable:$true] %s195
          %s197 = sshll.u32 %s189, 4
          %s198 = int_to_ptr.vmem [resolvable:$true] %s197
          %200 = dma.hbm_to_vmem [thread:$0]  %s196, 128, %s198, %s186
        $region32: #{tpu_custom_call.1} parent=27 // pred_fallthru
          _
      $region28: #{tpu_custom_call.1} parent=5 // pred_fallthru
        _
      %p201 = scmp.le.s32.totalorder 1, %s17
      %p202 = scmp.lt.s32.totalorder %s17, 3
      %p203 = pnand %p201, %p202
      %p204 = pneg %p203
      // Predicated region
      $region33: #{tpu_custom_call.1} parent=5 // pred_check
        _
      $region34: #{tpu_custom_call.1} parent=5 // pred_check_branch
        %206 = sbr.rel (%p203) target = $region36
      $region35: #{tpu_custom_call.1} parent=5 // pred_region
        %s207 = ssub.s32 %s17, 1
        %s208 = sand.u32 %s30, 1
        %s209 = scalar_lea.sflag [#allocation4], %s208
        %s210 = sand.u32 %s30, 1
        %s211 = smul.addr %s210, 8
        %s212 = scalar_lea.vmem [#allocation3], %s211
        // Predicated region
        $region37: #{tpu_custom_call.1} parent=35 // pred_check
          %p213 = pneg %p43
        $region38: #{tpu_custom_call.1} parent=35 // pred_check_branch
          %215 = sbr.rel (%p213) target = $region40
        $region39: #{tpu_custom_call.1} parent=35 // pred_region
          %217 = dma.done %s209, 128
        $region40: #{tpu_custom_call.1} parent=35 // pred_fallthru
          _
        // Predicated region
        $region41: #{tpu_custom_call.1} parent=35 // pred_check
          %p218 = pneg %p64
        $region42: #{tpu_custom_call.1} parent=35 // pred_check_branch
          %220 = sbr.rel (%p218) target = $region44
        $region43: #{tpu_custom_call.1} parent=35 // pred_region
          %222 = dma.done [#allocation7], 512
        $region44: #{tpu_custom_call.1} parent=35 // pred_fallthru
          _
        // Predicated region
        $region45: #{tpu_custom_call.1} parent=35 // pred_check
          %p223 = pneg %p85
        $region46: #{tpu_custom_call.1} parent=35 // pred_check_branch
          %225 = sbr.rel (%p223) target = $region48
        $region47: #{tpu_custom_call.1} parent=35 // pred_region
          %227 = dma.done [#allocation7], 512
        $region48: #{tpu_custom_call.1} parent=35 // pred_fallthru
          _
        %s228 = sand.u32 %s30, 1
        %s229 = scalar_lea.sflag [#allocation4], %s228
        %s230 = sand.u32 %s30, 1
        %s231 = smul.addr %s230, 8
        %s232 = scalar_lea.vmem [#allocation3], %s231
        %p233 = pneg %p43
        %p234 = pneg %p40
        %p235 = pneg %p64
        %p236 = pneg %p61
        %p237 = pneg %p85
        %p238 = pneg %p82
        %p239 = pneg %p106
        %p240 = pneg %p103
        %p241 = pneg %p132
        %p242 = pneg %p129
        %s243 = sand.u32 %s119, 1
        %s244 = scalar_lea.sflag [#allocation5], %s243
        %s245 = sand.u32 %s119, 1
        %s246 = smul.addr %s245, 8
        %s247 = scalar_lea.vmem [#allocation9], %s246
        %v248 = vld [vmem:[%s212] sm:$0xff]
        %v249 = vld [vmem:[#allocation6] sm:$0xff]
        %v250 = vld [vmem:[#allocation6 + $0x8] sm:$0xff]
        %v251 = vld [vmem:[#allocation6 + $0x10] sm:$0xff]
        %v252 = vld [vmem:[#allocation6 + $0x18] sm:$0xff]
        %vm253 = vcmask 261120
        %v255 = vsel %vm253, %v248, 0
        %257 = vmatpush.msra.mxu0 0.0
        %258 = vmatpush.msra.mxu0 0.0
        %259 = vmatpush.msra.mxu0 0.0
        %260 = vmatpush.msra.mxu0 0.0
        %261 = vmatpush.msra.mxu0 0.0
        %262 = vmatpush.msra.mxu0 0.0
        %263 = vmatpush.msra.mxu0 0.0
        %264 = vmatpush.msra.mxu0 0.0
        %265 = vmatpush.msra.mxu0 0.0
        %266 = vmatpush.msra.mxu0 0.0
        %267 = vmatpush.msra.mxu0 0.0
        %268 = vmatpush.msra.mxu0 0.0
        %269 = vmatpush.msra.mxu0 %v252
        %270 = vmatpush.msra.mxu0 %v251
        %271 = vmatpush.msra.mxu0 %v250
        %272 = vmatpush.msra.mxu0 %v249
        %273 = vmatmul.f32.gmra.mxu0 %v255
        %v274 = vpop.f32.mrf.mxu0
        %v275 = vadd.f32 0.0, %v274
        %276 = vdwg.mxu0
        %278 = vrot.lane.b32.xlu0 %v275, 96
        %v279 = vpop.permute.xlu0 %278
        %vm280 = vcmask 64512
        %v281 = vsel %vm280, %v275, 0
        %v283 = vsel %vm280, %v279, 0
        %285 = vmatpush.xpose.msra.mxu0 0.0
        %286 = vmatpush.xpose.msra.mxu0 0.0
        %287 = vmatpush.xpose.msra.mxu0 0.0
        %288 = vmatpush.xpose.msra.mxu0 0.0
        %289 = vmatpush.xpose.msra.mxu0 0.0
        %290 = vmatpush.xpose.msra.mxu0 0.0
        %291 = vmatpush.xpose.msra.mxu0 0.0
        %292 = vmatpush.xpose.msra.mxu0 0.0
        %293 = vmatpush.xpose.msra.mxu0 0.0
        %294 = vmatpush.xpose.msra.mxu0 0.0
        %295 = vmatpush.xpose.msra.mxu0 0.0
        %296 = vmatpush.xpose.msra.mxu0 0.0
        %297 = vmatpush.xpose.msra.mxu0 0.0
        %298 = vmatpush.xpose.msra.mxu0 0.0
        %299 = vmatpush.xpose.msra.mxu0 0.0
        %300 = vmatpush.xpose.msra.mxu0 %v283
        %301 = vmatmul.f32.gmra.mxu0 %v281
        %v302 = vpop.f32.mrf.mxu0
        %v303 = vadd.f32 0.0, %v302
        %304 = vdwg.mxu0
        %v305 = vsel %vm280, %v303, -inf
        %306 = vmax.xlane.f32.xlu0 %v305
        %v307 = vpop.xlane.xlu0 %306
        %v308 = vsub.f32 %v303, %v307
        %v309 = vmul.f32 %v308, 1.442695
        %v310 = vpow.pop %v309
        %v311 = vsel %vm280, %v310, 0.0
        %312 = vadd.xlane.f32.xlu0 %v311
        %v313 = vpop.xlane.xlu0 %312
        %314 = vrot.lane.b32.xlu0 %v275, 64
        %v315 = vpop.permute.xlu0 %314
        %v318 = vsel %vm280, %v310, 0
        %320 = vmatpush.msra.mxu0 0.0
        %321 = vmatpush.msra.mxu0 0.0
        %322 = vmatpush.msra.mxu0 0.0
        %323 = vmatpush.msra.mxu0 0.0
        %324 = vmatpush.msra.mxu0 0.0
        %325 = vmatpush.msra.mxu0 0.0
        %326 = vmatpush.msra.mxu0 0.0
        %327 = vmatpush.msra.mxu0 0.0
        %328 = vmatpush.msra.mxu0 0.0
        %329 = vmatpush.msra.mxu0 0.0
        %330 = vmatpush.msra.mxu0 0.0
        %331 = vmatpush.msra.mxu0 0.0
        %332 = vmatpush.msra.mxu0 0.0
        %333 = vmatpush.msra.mxu0 0.0
        %334 = vmatpush.msra.mxu0 0.0
        %335 = vmatpush.msra.mxu0 %v315
        %336 = vmatmul.f32.gmra.mxu0 %v318
        %v337 = vpop.f32.mrf.mxu0
        %v338 = vadd.f32 0.0, %v337
        %339 = vdwg.mxu0
        %v340 = vrcp.pop %v313
        %v341 = vmul.f32 %v338, %v340
        %342 = vst.msk [vmem:[#allocation2] sm:$0xff] %vm280, %v341
        %343 = vrot.lane.b32.xlu0 %v275, 120
        %v344 = vpop.permute.xlu0 %343
        %345 = vrot.lane.b32.xlu0 %v275, 88
        %v346 = vpop.permute.xlu0 %345
        %v347 = vsel %vm280, %v344, 0
        %v349 = vsel %vm280, %v346, 0
        %351 = vmatpush.xpose.msra.mxu0 0.0
        %352 = vmatpush.xpose.msra.mxu0 0.0
        %353 = vmatpush.xpose.msra.mxu0 0.0
        %354 = vmatpush.xpose.msra.mxu0 0.0
        %355 = vmatpush.xpose.msra.mxu0 0.0
        %356 = vmatpush.xpose.msra.mxu0 0.0
        %357 = vmatpush.xpose.msra.mxu0 0.0
        %358 = vmatpush.xpose.msra.mxu0 0.0
        %359 = vmatpush.xpose.msra.mxu0 0.0
        %360 = vmatpush.xpose.msra.mxu0 0.0
        %361 = vmatpush.xpose.msra.mxu0 0.0
        %362 = vmatpush.xpose.msra.mxu0 0.0
        %363 = vmatpush.xpose.msra.mxu0 0.0
        %364 = vmatpush.xpose.msra.mxu0 0.0
        %365 = vmatpush.xpose.msra.mxu0 0.0
        %366 = vmatpush.xpose.msra.mxu0 %v349
        %367 = vmatmul.f32.gmra.mxu0 %v347
        %v368 = vpop.f32.mrf.mxu0
        %v369 = vadd.f32 0.0, %v368
        %370 = vdwg.mxu0
        %v371 = vsel %vm280, %v369, -inf
        %372 = vmax.xlane.f32.xlu0 %v371
        %v373 = vpop.xlane.xlu0 %372
        %v374 = vsub.f32 %v369, %v373
        %v375 = vmul.f32 %v374, 1.442695
        %v376 = vpow.pop %v375
        %v377 = vsel %vm280, %v376, 0.0
        %378 = vadd.xlane.f32.xlu0 %v377
        %v379 = vpop.xlane.xlu0 %378
        %380 = vrot.lane.b32.xlu0 %v275, 56
        %v381 = vpop.permute.xlu0 %380
        %v384 = vsel %vm280, %v376, 0
        %386 = vmatpush.msra.mxu0 0.0
        %387 = vmatpush.msra.mxu0 0.0
        %388 = vmatpush.msra.mxu0 0.0
        %389 = vmatpush.msra.mxu0 0.0
        %390 = vmatpush.msra.mxu0 0.0
        %391 = vmatpush.msra.mxu0 0.0
        %392 = vmatpush.msra.mxu0 0.0
        %393 = vmatpush.msra.mxu0 0.0
        %394 = vmatpush.msra.mxu0 0.0
        %395 = vmatpush.msra.mxu0 0.0
        %396 = vmatpush.msra.mxu0 0.0
        %397 = vmatpush.msra.mxu0 0.0
        %398 = vmatpush.msra.mxu0 0.0
        %399 = vmatpush.msra.mxu0 0.0
        %400 = vmatpush.msra.mxu0 0.0
        %401 = vmatpush.msra.mxu0 %v381
        %402 = vmatmul.f32.gmra.mxu0 %v384
        %v403 = vpop.f32.mrf.mxu0
        %v404 = vadd.f32 0.0, %v403
        %405 = vdwg.mxu0
        %v406 = vrcp.pop %v379
        %v407 = vmul.f32 %v404, %v406
        %409 = vrot.lane.b32.xlu0 %v407, 8
        %v410 = vpop.permute.xlu0 %409
        %vm412 = vcmask 130112
        %413 = vst.msk [vmem:[#allocation2] sm:$0xff] %vm412, %v410
        %414 = vrot.lane.b32.xlu0 %v275, 112
        %v415 = vpop.permute.xlu0 %414
        %416 = vrot.lane.b32.xlu0 %v275, 80
        %v417 = vpop.permute.xlu0 %416
        %v418 = vsel %vm280, %v415, 0
        %v420 = vsel %vm280, %v417, 0
        %422 = vmatpush.xpose.msra.mxu0 0.0
        %423 = vmatpush.xpose.msra.mxu0 0.0
        %424 = vmatpush.xpose.msra.mxu0 0.0
        %425 = vmatpush.xpose.msra.mxu0 0.0
        %426 = vmatpush.xpose.msra.mxu0 0.0
        %427 = vmatpush.xpose.msra.mxu0 0.0
        %428 = vmatpush.xpose.msra.mxu0 0.0
        %429 = vmatpush.xpose.msra.mxu0 0.0
        %430 = vmatpush.xpose.msra.mxu0 0.0
        %431 = vmatpush.xpose.msra.mxu0 0.0
        %432 = vmatpush.xpose.msra.mxu0 0.0
        %433 = vmatpush.xpose.msra.mxu0 0.0
        %434 = vmatpush.xpose.msra.mxu0 0.0
        %435 = vmatpush.xpose.msra.mxu0 0.0
        %436 = vmatpush.xpose.msra.mxu0 0.0
        %437 = vmatpush.xpose.msra.mxu0 %v420
        %438 = vmatmul.f32.gmra.mxu0 %v418
        %v439 = vpop.f32.mrf.mxu0
        %v440 = vadd.f32 0.0, %v439
        %441 = vdwg.mxu0
        %v442 = vsel %vm280, %v440, -inf
        %443 = vmax.xlane.f32.xlu0 %v442
        %v444 = vpop.xlane.xlu0 %443
        %v445 = vsub.f32 %v440, %v444
        %v446 = vmul.f32 %v445, 1.442695
        %v447 = vpow.pop %v446
        %v448 = vsel %vm280, %v447, 0.0
        %449 = vadd.xlane.f32.xlu0 %v448
        %v450 = vpop.xlane.xlu0 %449
        %451 = vrot.lane.b32.xlu0 %v275, 48
        %v452 = vpop.permute.xlu0 %451
        %v455 = vsel %vm280, %v447, 0
        %457 = vmatpush.msra.mxu0 0.0
        %458 = vmatpush.msra.mxu0 0.0
        %459 = vmatpush.msra.mxu0 0.0
        %460 = vmatpush.msra.mxu0 0.0
        %461 = vmatpush.msra.mxu0 0.0
        %462 = vmatpush.msra.mxu0 0.0
        %463 = vmatpush.msra.mxu0 0.0
        %464 = vmatpush.msra.mxu0 0.0
        %465 = vmatpush.msra.mxu0 0.0
        %466 = vmatpush.msra.mxu0 0.0
        %467 = vmatpush.msra.mxu0 0.0
        %468 = vmatpush.msra.mxu0 0.0
        %469 = vmatpush.msra.mxu0 0.0
        %470 = vmatpush.msra.mxu0 0.0
        %471 = vmatpush.msra.mxu0 0.0
        %472 = vmatpush.msra.mxu0 %v452
        %473 = vmatmul.f32.gmra.mxu0 %v455
        %v474 = vpop.f32.mrf.mxu0
        %v475 = vadd.f32 0.0, %v474
        %476 = vdwg.mxu0
        %v477 = vrcp.pop %v450
        %v478 = vmul.f32 %v475, %v477
        %480 = vrot.lane.b32.xlu0 %v478, 16
        %v481 = vpop.permute.xlu0 %480
        %vm483 = vcmask 195712
        %484 = vst.msk [vmem:[#allocation2] sm:$0xff] %vm483, %v481
        %485 = vrot.lane.b32.xlu0 %v275, 104
        %v486 = vpop.permute.xlu0 %485
        %487 = vrot.lane.b32.xlu0 %v275, 72
        %v488 = vpop.permute.xlu0 %487
        %v489 = vsel %vm280, %v486, 0
        %v491 = vsel %vm280, %v488, 0
        %493 = vmatpush.xpose.msra.mxu0 0.0
        %494 = vmatpush.xpose.msra.mxu0 0.0
        %495 = vmatpush.xpose.msra.mxu0 0.0
        %496 = vmatpush.xpose.msra.mxu0 0.0
        %497 = vmatpush.xpose.msra.mxu0 0.0
        %498 = vmatpush.xpose.msra.mxu0 0.0
        %499 = vmatpush.xpose.msra.mxu0 0.0
        %500 = vmatpush.xpose.msra.mxu0 0.0
        %501 = vmatpush.xpose.msra.mxu0 0.0
        %502 = vmatpush.xpose.msra.mxu0 0.0
        %503 = vmatpush.xpose.msra.mxu0 0.0
        %504 = vmatpush.xpose.msra.mxu0 0.0
        %505 = vmatpush.xpose.msra.mxu0 0.0
        %506 = vmatpush.xpose.msra.mxu0 0.0
        %507 = vmatpush.xpose.msra.mxu0 0.0
        %508 = vmatpush.xpose.msra.mxu0 %v491
        %509 = vmatmul.f32.gmra.mxu0 %v489
        %v510 = vpop.f32.mrf.mxu0
        %v511 = vadd.f32 0.0, %v510
        %512 = vdwg.mxu0
        %v513 = vsel %vm280, %v511, -inf
        %514 = vmax.xlane.f32.xlu0 %v513
        %v515 = vpop.xlane.xlu0 %514
        %v516 = vsub.f32 %v511, %v515
        %v517 = vmul.f32 %v516, 1.442695
        %v518 = vpow.pop %v517
        %v519 = vsel %vm280, %v518, 0.0
        %520 = vadd.xlane.f32.xlu0 %v519
        %v521 = vpop.xlane.xlu0 %520
        %522 = vrot.lane.b32.xlu0 %v275, 40
        %v523 = vpop.permute.xlu0 %522
        %v526 = vsel %vm280, %v518, 0
        %528 = vmatpush.msra.mxu0 0.0
        %529 = vmatpush.msra.mxu0 0.0
        %530 = vmatpush.msra.mxu0 0.0
        %531 = vmatpush.msra.mxu0 0.0
        %532 = vmatpush.msra.mxu0 0.0
        %533 = vmatpush.msra.mxu0 0.0
        %534 = vmatpush.msra.mxu0 0.0
        %535 = vmatpush.msra.mxu0 0.0
        %536 = vmatpush.msra.mxu0 0.0
        %537 = vmatpush.msra.mxu0 0.0
        %538 = vmatpush.msra.mxu0 0.0
        %539 = vmatpush.msra.mxu0 0.0
        %540 = vmatpush.msra.mxu0 0.0
        %541 = vmatpush.msra.mxu0 0.0
        %542 = vmatpush.msra.mxu0 0.0
        %543 = vmatpush.msra.mxu0 %v523
        %544 = vmatmul.f32.gmra.mxu0 %v526
        %v545 = vpop.f32.mrf.mxu0
        %v546 = vadd.f32 0.0, %v545
        %547 = vdwg.mxu0
        %v548 = vrcp.pop %v521
        %v549 = vmul.f32 %v546, %v548
        %551 = vrot.lane.b32.xlu0 %v549, 24
        %v552 = vpop.permute.xlu0 %551
        %vm554 = vcmask 261312
        %555 = vst.msk [vmem:[#allocation2] sm:$0xff] %vm554, %v552
        %v556 = vld [vmem:[#allocation2] sm:$0xff]
        %v557 = vld [vmem:[#allocation8] sm:$0xff]
        %v558 = vld [vmem:[#allocation8 + $0x8] sm:$0xff]
        %v559 = vld [vmem:[#allocation8 + $0x10] sm:$0xff]
        %v560 = vld [vmem:[#allocation8 + $0x18] sm:$0xff]
        %v561 = vld [vmem:[%s3] sm:$0x1]
        %v563 = vperm.slane %v561, 0
        %v566 = vsel %vm253, %v556, 0
        %568 = vmatpush.msra.mxu0 0.0
        %569 = vmatpush.msra.mxu0 0.0
        %570 = vmatpush.msra.mxu0 0.0
        %571 = vmatpush.msra.mxu0 0.0
        %572 = vmatpush.msra.mxu0 0.0
        %573 = vmatpush.msra.mxu0 0.0
        %574 = vmatpush.msra.mxu0 0.0
        %575 = vmatpush.msra.mxu0 0.0
        %576 = vmatpush.msra.mxu0 0.0
        %577 = vmatpush.msra.mxu0 0.0
        %578 = vmatpush.msra.mxu0 0.0
        %579 = vmatpush.msra.mxu0 0.0
        %580 = vmatpush.msra.mxu0 %v560
        %581 = vmatpush.msra.mxu0 %v559
        %582 = vmatpush.msra.mxu0 %v558
        %583 = vmatpush.msra.mxu0 %v557
        %584 = vmatmul.f32.gmra.mxu0 %v566
        %v585 = vpop.f32.mrf.mxu0
        %v586 = vadd.f32 %v563, %v585
        %587 = vdwg.mxu0
        %588 = vst.msk [vmem:[%s247] sm:$0xff] %vm253, %v586
        %s589 = sand.u32 %s119, 1
        %s590 = scalar_lea.sflag [#allocation5], %s589
        %s591 = sand.u32 %s119, 1
        %s592 = smul.addr %s591, 8
        %s593 = scalar_lea.vmem [#allocation9], %s592
        // Predicated region
        $region49: #{tpu_custom_call.1} parent=35 // pred_check
          %p594 = pneg %p129
        $region50: #{tpu_custom_call.1} parent=35 // pred_check_branch
          %596 = sbr.rel (%p594) target = $region52
        $region51: #{tpu_custom_call.1} parent=35 // pred_region
          %598 = vsyncadd %s590, 0
          %s599 = smul.addr %s22, 8
          %s600 = scalar_lea.hbm %s4, %s599
          %s602 = sshll.u32 %s593, 4
          %s603 = int_to_ptr.vmem [resolvable:$true] %s602
          %s604 = sshll.u32 %s600, 4
          %s605 = int_to_ptr.hbm [resolvable:$true] %s604
          %607 = dma.vmem_to_hbm [thread:$0]  %s603, 128, %s605, %s590
        $region52: #{tpu_custom_call.1} parent=35 // pred_fallthru
          _
      $region36: #{tpu_custom_call.1} parent=5 // pred_fallthru
        _
      %p608 = scmp.le.s32.totalorder 2, %s17
      // Predicated region
      $region53: #{tpu_custom_call.1} parent=5 // pred_check
        %p609 = pneg %p608
      $region54: #{tpu_custom_call.1} parent=5 // pred_check_branch
        %611 = sbr.rel (%p609) target = $region56
      $region55: #{tpu_custom_call.1} parent=5 // pred_region
        %s612 = ssub.s32 %s17, 2
        // Predicated region
        $region57: #{tpu_custom_call.1} parent=55 // pred_check
          %p613 = pneg %p135
        $region58: #{tpu_custom_call.1} parent=55 // pred_check_branch
          %615 = sbr.rel (%p613) target = $region60
        $region59: #{tpu_custom_call.1} parent=55 // pred_region
          %s616 = sand.u32 %s120, 1
          %s617 = scalar_lea.sflag [#allocation5], %s616
          %s618 = sand.u32 %s120, 1
          %s619 = smul.addr %s618, 8
          %s620 = scalar_lea.vmem [#allocation9], %s619
          %622 = dma.done %s617, 128
        $region60: #{tpu_custom_call.1} parent=55 // pred_fallthru
          _
      $region56: #{tpu_custom_call.1} parent=5 // pred_fallthru
        _
    $region6: #{tpu_custom_call.1} parent=1 // loop_footer
      %s21 = sadd.s32 1, %s17
    $region7: #{tpu_custom_call.1} parent=1 // loop_footer_branch
      %16 = sbr.rel target = $region3
    $region8: #{tpu_custom_call.1} parent=1 // loop_exit
      _
    %623 = vsyncpa [#allocation4], 1
    %s624 = scalar_lea.sflag [#allocation4], 1
    %625 = vsyncpa %s624, 1
    %626 = vsyncpa [#allocation7], 1
    %627 = vsyncpa [#allocation5], 1
    %s628 = scalar_lea.sflag [#allocation5], 1
    %629 = vsyncpa %s628, 1

</llo_original>
